<compile_context>
chip_gen: v6e
topology: v6e:2x2x1
jax: 0.10.0
libtpu: 0.0.40
codegen_flags: <defaults>
</compile_context>

<pallas_src>
import functools

import jax
import jax.numpy as jnp
from jax.experimental import pallas as pl
from jax.experimental.pallas import tpu as pltpu

# ---- small, module-consistent sizes -----------------------------------------
B_ROOTS = 2      # number of graphs / root posts in the batch (len(data.root_idx))
SEQ = 8          # bert sequence length (config.text_max_length)
BERT_H = 32      # bert hidden size (synthetic stand-in for bert.config.hidden_size)
N_FEATURE = 128  # config.hidden_dim == config.graph_embedding_dim == fc out dim
N_PROP = 8       # number of propagation-graph nodes (len(data.x))
N_KNOW = 8       # number of knowledge-graph nodes (len(data.x_knowledge_idx))
VOCAB = 16       # len(token_dict)
BERT_VOCAB = 32  # synthetic bert token vocab
HEAD_HIDDEN = 100   # fc_rumor_1 out features
HEAD_PAD = 128      # padded head width (lane-aligned)
OUT_DIM = 2         # fc_rumor_2 out features


def _vmem_spec():
    """Whole-array BlockSpec resident in VMEM (no grid, no pipelining needed)."""
    return pl.BlockSpec(memory_space=pltpu.MemorySpace.VMEM)


# =============================================================================
# Single fused kernel:
#   text path : BERT token-emb gather -> mean over seq -> fc (H -> 128)
#   graph path: nn.Embedding gather   -> Mean_nBatch_geometric (segment mean)
#   head      : cat -> fc_rumor_1 -> leaky_relu -> fc_rumor_2 -> sigmoid
# Gathers are one-hot matmuls (tables stay in VMEM); head dims padded to 128.
# =============================================================================
def _fused_kernel(ids_ref, xid_ref, batch_ref,
                  bert_emb_ref, emb_ref, fc_w_ref, fc_b_ref,
                  w1a_ref, w1b_ref, b1_ref, w2_ref, b2_ref,
                  o_ref, *, seq_len):
    f32 = jnp.float32
    bf16 = jnp.bfloat16

    T = ids_ref.shape[0]            # B_ROOTS * SEQ
    Vb = bert_emb_ref.shape[0]      # bert vocab
    Vg = emb_ref.shape[0]           # graph-token vocab
    N = xid_ref.shape[0]            # propagation nodes
    B = o_ref.shape[0]              # roots / graphs

    # ---- text path: torch.mean(bert_out, dim=1) then self.fc --------------
    onehot_tok = (ids_ref[...] ==
                  jax.lax.broadcasted_iota(jnp.int32, (T, Vb), 1)).astype(f32)   # (T,Vb)
    tok_emb = jnp.dot(onehot_tok.astype(bf16), bert_emb_ref[...],
                      preferred_element_type=f32)                                # (T,Hb)
    row = jax.lax.broadcasted_iota(jnp.int32, (B, T), 0)
    col = jax.lax.broadcasted_iota(jnp.int32, (B, T), 1)
    sel = ((col >= row * seq_len) & (col < (row + 1) * seq_len)).astype(f32)      # (B,T)
    mean_emb = jnp.dot(sel.astype(bf16), tok_emb.astype(bf16),
                       preferred_element_type=f32) * (1.0 / seq_len)              # (B,Hb)
    text = (jnp.dot(mean_emb.astype(bf16), fc_w_ref[...],
                    preferred_element_type=f32) + fc_b_ref[...])                  # (B,128)

    # ---- graph path: embedding lookup + Mean_nBatch_geometric --------------
    onehot_v = (xid_ref[...] ==
                jax.lax.broadcasted_iota(jnp.int32, (N, Vg), 1)).astype(f32)      # (N,Vg)
    x_nodes = jnp.dot(onehot_v.astype(bf16), emb_ref[...],
                      preferred_element_type=f32)                                 # (N,128)
    onehot_g = (batch_ref[...] ==
                jax.lax.broadcasted_iota(jnp.int32, (B, N), 0)).astype(f32)       # (B,N)
    counts = jnp.sum(onehot_g, axis=1, keepdims=True)                             # (B,1)
    pooled = jnp.dot(onehot_g.astype(bf16), x_nodes.astype(bf16),
                     preferred_element_type=f32)                                  # (B,128)
    x_pool = pooled * pl.reciprocal(jnp.maximum(counts, 1.0), approx=True)

    # ---- head: cat -> fc_rumor_1 -> leaky_relu -> fc_rumor_2 -> sigmoid ----
    # cat + Linear(256,100) is split as W1[:128] @ x_pool + W1[128:] @ text.
    h = (jnp.dot(x_pool.astype(bf16), w1a_ref[...], preferred_element_type=f32)
         + jnp.dot(text.astype(bf16), w1b_ref[...], preferred_element_type=f32)
         + b1_ref[...])
    h = jnp.where(h > 0, h, 0.01 * h)            # F.leaky_relu (default slope 0.01)
    y = (jnp.dot(h.astype(bf16), w2_ref[...], preferred_element_type=f32)
         + b2_ref[...])
    o_ref[...] = jax.nn.sigmoid(y)               # (B, 128); cols >= 2 sliced off outside


def fused_forward(ids_col, x_ids_col, batch_row, kp, *, n_roots, seq_len):
    out_padded = pl.pallas_call(
        functools.partial(_fused_kernel, seq_len=seq_len),
        out_shape=jax.ShapeDtypeStruct((n_roots, HEAD_PAD), jnp.float32),
        in_specs=[_vmem_spec()] * 12,
        out_specs=_vmem_spec(),
    )(ids_col, x_ids_col, batch_row,
      kp["bert_tok_emb"], kp["embedding"], kp["fc_w"], kp["fc_b"],
      kp["w1a"], kp["w1b"], kp["b1"], kp["w2"], kp["b2"])
    return out_padded[:, :OUT_DIM]


# =============================================================================
# Parameter setup (deterministic, synthetic) + one-time kernel-ready packing
# =============================================================================
def init_params(key):
    ks = jax.random.split(key, 8)
    s = 0.05
    return {
        "bert_tok_emb": s * jax.random.normal(ks[0], (BERT_VOCAB, BERT_H), jnp.float32),
        "embedding":    s * jax.random.normal(ks[1], (VOCAB, N_FEATURE), jnp.float32),
        "fc_w":         s * jax.random.normal(ks[2], (BERT_H, 128), jnp.float32),
        "fc_b":         s * jax.random.normal(ks[3], (1, 128), jnp.float32),
        "fc1_w":        s * jax.random.normal(ks[4], (256, HEAD_HIDDEN), jnp.float32),
        "fc1_b":        s * jax.random.normal(ks[5], (1, HEAD_HIDDEN), jnp.float32),
        "fc2_w":        s * jax.random.normal(ks[6], (HEAD_HIDDEN, OUT_DIM), jnp.float32),
        "fc2_b":        s * jax.random.normal(ks[7], (1, OUT_DIM), jnp.float32),
    }


def prepare_kernel_params(params):
    """One-time pad (lane-dense) + bf16 cast of all matmul operands."""
    bf16 = jnp.bfloat16
    F = N_FEATURE
    pad_h = HEAD_PAD - HEAD_HIDDEN
    pad_o = HEAD_PAD - OUT_DIM
    w1 = params["fc1_w"]                                    # (256, 100)
    return {
        "bert_tok_emb": params["bert_tok_emb"].astype(bf16),
        "embedding":    params["embedding"].astype(bf16),
        "fc_w":         params["fc_w"].astype(bf16),
        "fc_b":         params["fc_b"],
        "w1a": jnp.pad(w1[:F], ((0, 0), (0, pad_h))).astype(bf16),    # (128,128)
        "w1b": jnp.pad(w1[F:], ((0, 0), (0, pad_h))).astype(bf16),    # (128,128)
        "b1":  jnp.pad(params["fc1_b"], ((0, 0), (0, pad_h))),        # (1,128) f32
        "w2":  jnp.pad(params["fc2_w"], ((0, pad_h), (0, pad_o))).astype(bf16),  # (128,128)
        "b2":  jnp.pad(params["fc2_b"], ((0, 0), (0, pad_o))),        # (1,128) f32
    }


# =============================================================================
# Forward pass (mirrors DynamicKnowledgeGraphAttention.forward)
# =============================================================================
def forward(kernel_params, data):
    # TODO(synk): the pretrained BertModel has no clean Pallas equivalent; its
    # sequence output is replaced by a deterministic synthetic token-embedding
    # lookup (done inside the fused kernel as a one-hot matmul).
    # TODO(synk): RippleKnowledgeGraphAttention_nBatch and CrossCompressUnit1
    # are external modules (Python-set edge bookkeeping + random.sample); they
    # are passed through as identity, so data["x_knowledge_idx"] is unused.
    ids_col = data["input_ids"].reshape(-1, 1).astype(jnp.int32)      # (B*S, 1)
    x_ids_col = data["x"].reshape(-1, 1).astype(jnp.int32)            # (N_p, 1)
    batch_row = data["batch"].reshape(1, -1).astype(jnp.int32)        # (1, N_p)
    n_roots, seq_len = data["input_ids"].shape
    return fused_forward(ids_col, x_ids_col, batch_row, kernel_params,
                         n_roots=n_roots, seq_len=seq_len)            # (B, 2)


# =============================================================================
if __name__ == "__main__":
    key = jax.random.PRNGKey(0)
    pkey, dkey = jax.random.split(key)
    params = init_params(pkey)
    kernel_params = prepare_kernel_params(params)

    dk = jax.random.split(dkey, 3)
    data = {
        # propagation-graph node token ids (data.x)
        "x": jax.random.randint(dk[0], (N_PROP,), 0, VOCAB, jnp.int32),
        # knowledge-graph node token ids (data.x_knowledge_idx) -- unused (see TODO)
        "x_knowledge_idx": jax.random.randint(dk[1], (N_KNOW,), 0, VOCAB, jnp.int32),
        # per-root bert input ids (mid2bert_tokenizer[root]['input_ids'])
        "input_ids": jax.random.randint(dk[2], (B_ROOTS, SEQ), 0, BERT_VOCAB, jnp.int32),
        # graph membership of each propagation node (data.batch)
        "batch": jnp.array([0, 0, 0, 0, 1, 1, 1, 1], jnp.int32),
    }

    out = forward(kernel_params, data)
    out = jax.block_until_ready(out)
    assert out.shape == (B_ROOTS, OUT_DIM)
    assert bool(jnp.all((out >= 0.0) & (out <= 1.0)))
    print("KERNEL_OK")
</pallas_src>

<mosaic_0001>
module attributes {stable_mosaic.version = 11 : i64} {
  func.func @_fused_kernel(%arg0: memref<16x1xi32, #tpu.memory_space<vmem>>, %arg1: memref<8x1xi32, #tpu.memory_space<vmem>>, %arg2: memref<1x8xi32, #tpu.memory_space<vmem>>, %arg3: memref<32x32xbf16, #tpu.memory_space<vmem>>, %arg4: memref<16x128xbf16, #tpu.memory_space<vmem>>, %arg5: memref<32x128xbf16, #tpu.memory_space<vmem>>, %arg6: memref<1x128xf32, #tpu.memory_space<vmem>>, %arg7: memref<128x128xbf16, #tpu.memory_space<vmem>>, %arg8: memref<128x128xbf16, #tpu.memory_space<vmem>>, %arg9: memref<1x128xf32, #tpu.memory_space<vmem>>, %arg10: memref<128x128xbf16, #tpu.memory_space<vmem>>, %arg11: memref<1x128xf32, #tpu.memory_space<vmem>>, %arg12: memref<2x128xf32, #tpu.memory_space<vmem>>) attributes {dimension_semantics = [], scalar_prefetch = 0 : i64, scratch_operands = 0 : i64, tpu.core_type = #tpu.core_type<tc>} {
    %c0 = arith.constant 0 : index
    %c0_0 = arith.constant 0 : index
    %0 = vector.load %arg0[%c0, %c0_0] : memref<16x1xi32, #tpu.memory_space<vmem>>, vector<16x1xi32>
    %1 = tpu.iota {dimensions = array<i32: 1>} : vector<16x32xi32>
    %2 = vector.broadcast %0 : vector<16x1xi32> to vector<16x32xi32>
    %3 = arith.cmpi eq, %2, %1 : vector<16x32xi32>
    %4 = arith.extui %3 : vector<16x32xi1> to vector<16x32xi32>
    %5 = arith.sitofp %4 : vector<16x32xi32> to vector<16x32xf32>
    %6 = arith.truncf %5 : vector<16x32xf32> to vector<16x32xbf16>
    %c0_1 = arith.constant 0 : index
    %c0_2 = arith.constant 0 : index
    %7 = vector.load %arg3[%c0_1, %c0_2] : memref<32x32xbf16, #tpu.memory_space<vmem>>, vector<32x32xbf16>
    %cst = arith.constant dense<0.000000e+00> : vector<16x32xf32>
    %8 = tpu.matmul %6, %7, %cst {dimension_numbers = #tpu.dot_dimension_numbers<[1], [0], [0], [1], [0, 0, 1, 1], [], []>} : vector<16x32xbf16>, vector<32x32xbf16>, vector<16x32xf32> -> vector<16x32xf32>
    %9 = tpu.iota {dimensions = array<i32: 0>} : vector<2x16xi32>
    %10 = tpu.iota {dimensions = array<i32: 1>} : vector<2x16xi32>
    %c8_i32 = arith.constant 8 : i32
    %11 = vector.broadcast %c8_i32 : i32 to vector<2x16xi32>
    %12 = arith.muli %9, %11 : vector<2x16xi32>
    %13 = arith.cmpi sge, %10, %12 : vector<2x16xi32>
    %c1_i32 = arith.constant 1 : i32
    %14 = vector.broadcast %c1_i32 : i32 to vector<2x16xi32>
    %15 = arith.addi %9, %14 : vector<2x16xi32>
    %c8_i32_3 = arith.constant 8 : i32
    %16 = vector.broadcast %c8_i32_3 : i32 to vector<2x16xi32>
    %17 = arith.muli %15, %16 : vector<2x16xi32>
    %18 = arith.cmpi slt, %10, %17 : vector<2x16xi32>
    %19 = arith.andi %13, %18 : vector<2x16xi1>
    %20 = arith.extui %19 : vector<2x16xi1> to vector<2x16xi32>
    %21 = arith.sitofp %20 : vector<2x16xi32> to vector<2x16xf32>
    %22 = arith.truncf %21 : vector<2x16xf32> to vector<2x16xbf16>
    %23 = arith.truncf %8 : vector<16x32xf32> to vector<16x32xbf16>
    %cst_4 = arith.constant dense<0.000000e+00> : vector<2x32xf32>
    %24 = tpu.matmul %22, %23, %cst_4 {dimension_numbers = #tpu.dot_dimension_numbers<[1], [0], [0], [1], [0, 0, 1, 1], [], []>} : vector<2x16xbf16>, vector<16x32xbf16>, vector<2x32xf32> -> vector<2x32xf32>
    %cst_5 = arith.constant 1.250000e-01 : f32
    %25 = vector.broadcast %cst_5 : f32 to vector<2x32xf32>
    %26 = arith.mulf %24, %25 : vector<2x32xf32>
    %27 = arith.truncf %26 : vector<2x32xf32> to vector<2x32xbf16>
    %c0_6 = arith.constant 0 : index
    %c0_7 = arith.constant 0 : index
    %28 = vector.load %arg5[%c0_6, %c0_7] : memref<32x128xbf16, #tpu.memory_space<vmem>>, vector<32x128xbf16>
    %cst_8 = arith.constant dense<0.000000e+00> : vector<2x128xf32>
    %29 = tpu.matmul %27, %28, %cst_8 {dimension_numbers = #tpu.dot_dimension_numbers<[1], [0], [0], [1], [0, 0, 1, 1], [], []>} : vector<2x32xbf16>, vector<32x128xbf16>, vector<2x128xf32> -> vector<2x128xf32>
    %c0_9 = arith.constant 0 : index
    %c0_10 = arith.constant 0 : index
    %30 = vector.load %arg6[%c0_9, %c0_10] : memref<1x128xf32, #tpu.memory_space<vmem>>, vector<1x128xf32>
    %31 = vector.broadcast %30 : vector<1x128xf32> to vector<2x128xf32>
    %32 = arith.addf %29, %31 : vector<2x128xf32>
    %c0_11 = arith.constant 0 : index
    %c0_12 = arith.constant 0 : index
    %33 = vector.load %arg1[%c0_11, %c0_12] : memref<8x1xi32, #tpu.memory_space<vmem>>, vector<8x1xi32>
    %34 = tpu.iota {dimensions = array<i32: 1>} : vector<8x16xi32>
    %35 = vector.broadcast %33 : vector<8x1xi32> to vector<8x16xi32>
    %36 = arith.cmpi eq, %35, %34 : vector<8x16xi32>
    %37 = arith.extui %36 : vector<8x16xi1> to vector<8x16xi32>
    %38 = arith.sitofp %37 : vector<8x16xi32> to vector<8x16xf32>
    %39 = arith.truncf %38 : vector<8x16xf32> to vector<8x16xbf16>
    %c0_13 = arith.constant 0 : index
    %c0_14 = arith.constant 0 : index
    %40 = vector.load %arg4[%c0_13, %c0_14] : memref<16x128xbf16, #tpu.memory_space<vmem>>, vector<16x128xbf16>
    %cst_15 = arith.constant dense<0.000000e+00> : vector<8x128xf32>
    %41 = tpu.matmul %39, %40, %cst_15 {dimension_numbers = #tpu.dot_dimension_numbers<[1], [0], [0], [1], [0, 0, 1, 1], [], []>} : vector<8x16xbf16>, vector<16x128xbf16>, vector<8x128xf32> -> vector<8x128xf32>
    %c0_16 = arith.constant 0 : index
    %c0_17 = arith.constant 0 : index
    %42 = vector.load %arg2[%c0_16, %c0_17] : memref<1x8xi32, #tpu.memory_space<vmem>>, vector<1x8xi32>
    %43 = tpu.iota {dimensions = array<i32: 0>} : vector<2x8xi32>
    %44 = vector.broadcast %42 : vector<1x8xi32> to vector<2x8xi32>
    %45 = arith.cmpi eq, %44, %43 : vector<2x8xi32>
    %46 = arith.extui %45 : vector<2x8xi1> to vector<2x8xi32>
    %47 = arith.sitofp %46 : vector<2x8xi32> to vector<2x8xf32>
    %cst_18 = arith.constant dense<0.000000e+00> : vector<2xf32>
    %48 = vector.multi_reduction <add>, %47, %cst_18 [1] : vector<2x8xf32> to vector<2xf32>
    %49 = vector.shape_cast %48 : vector<2xf32> to vector<2x1xf32>
    %50 = arith.truncf %47 : vector<2x8xf32> to vector<2x8xbf16>
    %51 = arith.truncf %41 : vector<8x128xf32> to vector<8x128xbf16>
    %cst_19 = arith.constant dense<0.000000e+00> : vector<2x128xf32>
    %52 = tpu.matmul %50, %51, %cst_19 {dimension_numbers = #tpu.dot_dimension_numbers<[1], [0], [0], [1], [0, 0, 1, 1], [], []>} : vector<2x8xbf16>, vector<8x128xbf16>, vector<2x128xf32> -> vector<2x128xf32>
    %cst_20 = arith.constant 1.000000e+00 : f32
    %53 = vector.broadcast %cst_20 : f32 to vector<2x1xf32>
    %54 = arith.maximumf %49, %53 : vector<2x1xf32>
    %55 = tpu.reciprocal %54 {approx = true} : vector<2x1xf32> -> vector<2x1xf32>
    %56 = vector.broadcast %55 : vector<2x1xf32> to vector<2x128xf32>
    %57 = arith.mulf %52, %56 : vector<2x128xf32>
    %58 = arith.truncf %57 : vector<2x128xf32> to vector<2x128xbf16>
    %c0_21 = arith.constant 0 : index
    %c0_22 = arith.constant 0 : index
    %59 = vector.load %arg7[%c0_21, %c0_22] : memref<128x128xbf16, #tpu.memory_space<vmem>>, vector<128x128xbf16>
    %cst_23 = arith.constant dense<0.000000e+00> : vector<2x128xf32>
    %60 = tpu.matmul %58, %59, %cst_23 {dimension_numbers = #tpu.dot_dimension_numbers<[1], [0], [0], [1], [0, 0, 1, 1], [], []>} : vector<2x128xbf16>, vector<128x128xbf16>, vector<2x128xf32> -> vector<2x128xf32>
    %61 = arith.truncf %32 : vector<2x128xf32> to vector<2x128xbf16>
    %c0_24 = arith.constant 0 : index
    %c0_25 = arith.constant 0 : index
    %62 = vector.load %arg8[%c0_24, %c0_25] : memref<128x128xbf16, #tpu.memory_space<vmem>>, vector<128x128xbf16>
    %cst_26 = arith.constant dense<0.000000e+00> : vector<2x128xf32>
    %63 = tpu.matmul %61, %62, %cst_26 {dimension_numbers = #tpu.dot_dimension_numbers<[1], [0], [0], [1], [0, 0, 1, 1], [], []>} : vector<2x128xbf16>, vector<128x128xbf16>, vector<2x128xf32> -> vector<2x128xf32>
    %64 = arith.addf %60, %63 : vector<2x128xf32>
    %c0_27 = arith.constant 0 : index
    %c0_28 = arith.constant 0 : index
    %65 = vector.load %arg9[%c0_27, %c0_28] : memref<1x128xf32, #tpu.memory_space<vmem>>, vector<1x128xf32>
    %66 = vector.broadcast %65 : vector<1x128xf32> to vector<2x128xf32>
    %67 = arith.addf %64, %66 : vector<2x128xf32>
    %cst_29 = arith.constant 0.000000e+00 : f32
    %68 = vector.broadcast %cst_29 : f32 to vector<2x128xf32>
    %69 = arith.cmpf ogt, %67, %68 : vector<2x128xf32>
    %cst_30 = arith.constant 0.00999999977 : f32
    %70 = vector.broadcast %cst_30 : f32 to vector<2x128xf32>
    %71 = arith.mulf %70, %67 : vector<2x128xf32>
    %72 = arith.select %69, %67, %71 : vector<2x128xi1>, vector<2x128xf32>
    %73 = arith.truncf %72 : vector<2x128xf32> to vector<2x128xbf16>
    %c0_31 = arith.constant 0 : index
    %c0_32 = arith.constant 0 : index
    %74 = vector.load %arg10[%c0_31, %c0_32] : memref<128x128xbf16, #tpu.memory_space<vmem>>, vector<128x128xbf16>
    %cst_33 = arith.constant dense<0.000000e+00> : vector<2x128xf32>
    %75 = tpu.matmul %73, %74, %cst_33 {dimension_numbers = #tpu.dot_dimension_numbers<[1], [0], [0], [1], [0, 0, 1, 1], [], []>} : vector<2x128xbf16>, vector<128x128xbf16>, vector<2x128xf32> -> vector<2x128xf32>
    %c0_34 = arith.constant 0 : index
    %c0_35 = arith.constant 0 : index
    %76 = vector.load %arg11[%c0_34, %c0_35] : memref<1x128xf32, #tpu.memory_space<vmem>>, vector<1x128xf32>
    %77 = vector.broadcast %76 : vector<1x128xf32> to vector<2x128xf32>
    %78 = arith.addf %75, %77 : vector<2x128xf32>
    %79 = arith.negf %78 : vector<2x128xf32>
    %80 = math.exp %79 : vector<2x128xf32>
    %cst_36 = arith.constant 1.000000e+00 : f32
    %81 = vector.broadcast %cst_36 : f32 to vector<2x128xf32>
    %82 = arith.addf %81, %80 : vector<2x128xf32>
    %83 = arith.divf %81, %82 : vector<2x128xf32>
    %c0_37 = arith.constant 0 : index
    %c0_38 = arith.constant 0 : index
    %84 = vector.load %arg12[%c0_37, %c0_38] : memref<2x128xf32, #tpu.memory_space<vmem>>, vector<2x128xf32>
    tpu.vector_store %arg12[%c0_37, %c0_38], %83 {strides = array<i32>} : memref<2x128xf32, #tpu.memory_space<vmem>>, vector<2x128xf32>,
    return
  }
}

</mosaic_0001>

<llo_original>
// kernel: tpu_custom_call.1
$region0: #{tpu_custom_call.1}
  #allocation0 [shape = 'u32[]', space=smem, size = 0x4, offset = 0x4, fixed_abs, tag = 'smem constant byte address 0x4 - core index']
  #allocation1 [shape = 'u32[144,128]{1,0:T(1,128)}', space=vmem, size = 0x12000, scoped, tag = 'internal scratch']
  %s0 = inlined_call_operand.vmem [shape: s32[16,1], index: 0, kind: input, shape index: {}]
  %s1 = inlined_call_operand.vmem [shape: s32[8,1], index: 1, kind: input, shape index: {}]
  %s2 = inlined_call_operand.vmem [shape: s32[1,8], index: 2, kind: input, shape index: {}]
  %s3 = inlined_call_operand.vmem [shape: bf16[32,32], index: 3, kind: input, shape index: {}]
  %s4 = inlined_call_operand.hbm [shape: bf16[16,128], index: 4, kind: input, shape index: {}]
  %s5 = inlined_call_operand.vmem [shape: bf16[32,128], index: 5, kind: input, shape index: {}]
  %s6 = inlined_call_operand.vmem [shape: f32[1,128], index: 6, kind: input, shape index: {}]
  %s7 = inlined_call_operand.hbm [shape: bf16[128,128], index: 7, kind: input, shape index: {}]
  %s8 = inlined_call_operand.hbm [shape: bf16[128,128], index: 8, kind: input, shape index: {}]
  %s9 = inlined_call_operand.vmem [shape: f32[1,128], index: 9, kind: input, shape index: {}]
  %s10 = inlined_call_operand.hbm [shape: bf16[128,128], index: 10, kind: input, shape index: {}]
  %s11 = inlined_call_operand.vmem [shape: f32[1,128], index: 11, kind: input, shape index: {}]
  %s12 = inlined_call_operand.hbm [shape: f32[2,128], index: 12, kind: output, shape index: {}]
  %s13 = sld [smem:[#allocation0]]
  $region74: #{tpu_custom_call.1} parent=0
    _
  %s15 = ssub.s32 1, %s13
  %s16 = scalar_select 0, %s15, %s13
  $region1: #{tpu_custom_call.1} parent=0
    #allocation2 [shape = 'u8[4096]{0}', space=vmem, size = 0x1000, scoped, tag = 'input window, operand 4, single buffered']
    #allocation3 [shape = 's32[1]{0}', space=sflag, size = 0x4, scoped, tag = 'scoped memory for tpu_custom_call.1']
    #allocation4 [shape = 's32[1]{0}', space=sflag, size = 0x4, scoped, tag = 'scoped memory for tpu_custom_call.1']
    #allocation5 [shape = 'u8[32768]{0}', space=vmem, size = 0x8000, scoped, tag = 'input window, operand 7, single buffered']
    #allocation6 [shape = 's32[1]{0}', space=sflag, size = 0x4, scoped, tag = 'scoped memory for tpu_custom_call.1']
    #allocation7 [shape = 'u8[32768]{0}', space=vmem, size = 0x8000, scoped, tag = 'input window, operand 8, single buffered']
    #allocation8 [shape = 'u8[32768]{0}', space=vmem, size = 0x8000, scoped, tag = 'input window, operand 10, single buffered']
    #allocation9 [shape = 's32[1]{0}', space=sflag, size = 0x4, scoped, tag = 'scoped memory for tpu_custom_call.1']
    #allocation10 [shape = 'u8[1024]{0}', space=vmem, size = 0x400, scoped, tag = 'output window, operand 0, single buffered']
    %17 = vsyncpa [#allocation3], 0
    %18 = vsyncpa [#allocation6], 0
    %19 = vsyncpa [#allocation9], 0
    %20 = vsyncpa [#allocation4], 0
    // Predicated region
    $region2: #{tpu_custom_call.1} parent=1 // pred_check
      _
    $region3: #{tpu_custom_call.1} parent=1 // pred_check_branch
      %22 = sbr.rel (0) target = $region5
    $region4: #{tpu_custom_call.1} parent=1 // pred_region
      _
    $region5: #{tpu_custom_call.1} parent=1 // pred_fallthru
      _
    // Predicated region
    $region6: #{tpu_custom_call.1} parent=1 // pred_check
      _
    $region7: #{tpu_custom_call.1} parent=1 // pred_check_branch
      %24 = sbr.rel (0) target = $region9
    $region8: #{tpu_custom_call.1} parent=1 // pred_region
      _
    $region9: #{tpu_custom_call.1} parent=1 // pred_fallthru
      _
    // Predicated region
    $region10: #{tpu_custom_call.1} parent=1 // pred_check
      _
    $region11: #{tpu_custom_call.1} parent=1 // pred_check_branch
      %26 = sbr.rel (0) target = $region13
    $region12: #{tpu_custom_call.1} parent=1 // pred_region
      _
    $region13: #{tpu_custom_call.1} parent=1 // pred_fallthru
      _
    // Predicated region
    $region14: #{tpu_custom_call.1} parent=1 // pred_check
      _
    $region15: #{tpu_custom_call.1} parent=1 // pred_check_branch
      %28 = sbr.rel (0) target = $region17
    $region16: #{tpu_custom_call.1} parent=1 // pred_region
      _
    $region17: #{tpu_custom_call.1} parent=1 // pred_fallthru
      _
    // Predicated region
    $region18: #{tpu_custom_call.1} parent=1 // pred_check
      _
    $region19: #{tpu_custom_call.1} parent=1 // pred_check_branch
      %30 = sbr.rel (0) target = $region21
    $region20: #{tpu_custom_call.1} parent=1 // pred_region
      %s32 = ssub.s32 128, 128
      %33 = vsyncadd [#allocation3], %s32
      %s34 = sshll.u32 [#allocation2], 4
      %s35 = int_to_ptr.vmem [resolvable:$true] %s34
      %40 = dma.hbm_to_vmem [thread:$0]  %s4, 128, %s35, [#allocation3], 64, 64, 4
    $region21: #{tpu_custom_call.1} parent=1 // pred_fallthru
      _
    // Predicated region
    $region22: #{tpu_custom_call.1} parent=1 // pred_check
      _
    $region23: #{tpu_custom_call.1} parent=1 // pred_check_branch
      %42 = sbr.rel (0) target = $region25
    $region24: #{tpu_custom_call.1} parent=1 // pred_region
      _
    $region25: #{tpu_custom_call.1} parent=1 // pred_fallthru
      _
    // Predicated region
    $region26: #{tpu_custom_call.1} parent=1 // pred_check
      _
    $region27: #{tpu_custom_call.1} parent=1 // pred_check_branch
      %44 = sbr.rel (0) target = $region29
    $region28: #{tpu_custom_call.1} parent=1 // pred_region
      _
    $region29: #{tpu_custom_call.1} parent=1 // pred_fallthru
      _
    // Predicated region
    $region30: #{tpu_custom_call.1} parent=1 // pred_check
      _
    $region31: #{tpu_custom_call.1} parent=1 // pred_check_branch
      %46 = sbr.rel (0) target = $region33
    $region32: #{tpu_custom_call.1} parent=1 // pred_region
      %s48 = ssub.s32 1024, 1024
      %49 = vsyncadd [#allocation6], %s48
      %s50 = sshll.u32 [#allocation5], 4
      %s51 = int_to_ptr.vmem [resolvable:$true] %s50
      %56 = dma.hbm_to_vmem [thread:$0]  %s7, 1024, %s51, [#allocation6], 64, 64, 4
    $region33: #{tpu_custom_call.1} parent=1 // pred_fallthru
      _
    // Predicated region
    $region34: #{tpu_custom_call.1} parent=1 // pred_check
      _
    $region35: #{tpu_custom_call.1} parent=1 // pred_check_branch
      %58 = sbr.rel (0) target = $region37
    $region36: #{tpu_custom_call.1} parent=1 // pred_region
      %s60 = ssub.s32 1024, 1024
      %61 = vsyncadd [#allocation6], %s60
      %s62 = sshll.u32 [#allocation7], 4
      %s63 = int_to_ptr.vmem [resolvable:$true] %s62
      %68 = dma.hbm_to_vmem [thread:$0]  %s8, 1024, %s63, [#allocation6], 64, 64, 4
    $region37: #{tpu_custom_call.1} parent=1 // pred_fallthru
      _
    // Predicated region
    $region38: #{tpu_custom_call.1} parent=1 // pred_check
      _
    $region39: #{tpu_custom_call.1} parent=1 // pred_check_branch
      %70 = sbr.rel (0) target = $region41
    $region40: #{tpu_custom_call.1} parent=1 // pred_region
      _
    $region41: #{tpu_custom_call.1} parent=1 // pred_fallthru
      _
    // Predicated region
    $region42: #{tpu_custom_call.1} parent=1 // pred_check
      _
    $region43: #{tpu_custom_call.1} parent=1 // pred_check_branch
      %72 = sbr.rel (0) target = $region45
    $region44: #{tpu_custom_call.1} parent=1 // pred_region
      %s74 = ssub.s32 1024, 1024
      %75 = vsyncadd [#allocation9], %s74
      %s76 = sshll.u32 [#allocation8], 4
      %s77 = int_to_ptr.vmem [resolvable:$true] %s76
      %82 = dma.hbm_to_vmem [thread:$0]  %s10, 1024, %s77, [#allocation9], 64, 64, 4
    $region45: #{tpu_custom_call.1} parent=1 // pred_fallthru
      _
    // Predicated region
    $region46: #{tpu_custom_call.1} parent=1 // pred_check
      _
    $region47: #{tpu_custom_call.1} parent=1 // pred_check_branch
      %84 = sbr.rel (0) target = $region49
    $region48: #{tpu_custom_call.1} parent=1 // pred_region
      _
    $region49: #{tpu_custom_call.1} parent=1 // pred_fallthru
      _
    // Predicated region
    $region50: #{tpu_custom_call.1} parent=1 // pred_check
      _
    $region51: #{tpu_custom_call.1} parent=1 // pred_check_branch
      %86 = sbr.rel (0) target = $region53
    $region52: #{tpu_custom_call.1} parent=1 // pred_region
      %87 = dma.done [#allocation3], 128
    $region53: #{tpu_custom_call.1} parent=1 // pred_fallthru
      _
    // Predicated region
    $region54: #{tpu_custom_call.1} parent=1 // pred_check
      _
    $region55: #{tpu_custom_call.1} parent=1 // pred_check_branch
      %89 = sbr.rel (0) target = $region57
    $region56: #{tpu_custom_call.1} parent=1 // pred_region
      %90 = dma.done [#allocation6], 1024
    $region57: #{tpu_custom_call.1} parent=1 // pred_fallthru
      _
    // Predicated region
    $region58: #{tpu_custom_call.1} parent=1 // pred_check
      _
    $region59: #{tpu_custom_call.1} parent=1 // pred_check_branch
      %92 = sbr.rel (0) target = $region61
    $region60: #{tpu_custom_call.1} parent=1 // pred_region
      %93 = dma.done [#allocation6], 1024
    $region61: #{tpu_custom_call.1} parent=1 // pred_fallthru
      _
    // Predicated region
    $region62: #{tpu_custom_call.1} parent=1 // pred_check
      _
    $region63: #{tpu_custom_call.1} parent=1 // pred_check_branch
      %95 = sbr.rel (0) target = $region65
    $region64: #{tpu_custom_call.1} parent=1 // pred_region
      %96 = dma.done [#allocation9], 1024
    $region65: #{tpu_custom_call.1} parent=1 // pred_fallthru
      _
    %v98 = vld [vmem:[%s0] sm:$0xff]
    %v99 = vld [vmem:[%s0 + $0x8] sm:$0xff]
    %v100 = vlaneseq
    %v101 = vand.u32 %v100, 127
    %102 = vset.pattern.permute.xlu0 0
    %103 = vperm.xlu0 %102, %v98
    %v104 = vpop.permute.xlu0 %103
    %105 = vset.pattern.permute.xlu0 0
    %106 = vperm.xlu0 %105, %v99
    %v107 = vpop.permute.xlu0 %106
    %vm108 = vcmp.eq.s32.totalorder %v104, %v101
    %vm109 = vcmp.eq.s32.totalorder %v107, %v101
    %v110 = vsel %vm108, 1, 0
    %v111 = vsel %vm109, 1, 0
    %v112 = vcvt.s32.f32 %v110
    %v113 = vcvt.s32.f32 %v111
    %v114 = vpack.c.bf16 %v113, %v112
    %v115 = vld [vmem:[%s3] sm:$0xf]
    %v116 = vld [vmem:[%s3 + $0x4] sm:$0xf]
    %v117 = vld [vmem:[%s3 + $0x8] sm:$0xf]
    %v118 = vld [vmem:[%s3 + $0xc] sm:$0xf]
    %v123 = vunpack.c.l.b16 %v115
    %v124 = vunpack.c.l.b16 %v116
    %v125 = vunpack.c.l.b16 %v117
    %v126 = vunpack.c.l.b16 %v118
    %v127 = vpack.c.b16 %v124, %v123
    %v128 = vpack.c.b16 %v126, %v125
    %vm131 = vcmask 261120
    %v133 = vsel %vm131, %v114, 0
    %135 = vmatprep.subr.bf16.mxu0 0
    %136 = vmatpush1.bf16.msra.mxu0 0
    %137 = vmatprep.subr.bf16.mxu0 0
    %138 = vmatpush1.bf16.msra.mxu0 0
    %139 = vmatprep.subr.bf16.mxu0 0
    %140 = vmatpush1.bf16.msra.mxu0 0
    %141 = vmatprep.subr.bf16.mxu0 0
    %142 = vmatpush1.bf16.msra.mxu0 0
    %143 = vmatprep.subr.bf16.mxu0 0
    %144 = vmatpush1.bf16.msra.mxu0 0
    %145 = vmatprep.subr.bf16.mxu0 0
    %146 = vmatpush1.bf16.msra.mxu0 0
    %147 = vmatprep.subr.bf16.mxu0 0
    %148 = vmatpush1.bf16.msra.mxu0 %v128
    %149 = vmatprep.subr.bf16.mxu0 0
    %150 = vmatpush1.bf16.msra.mxu0 %v127
    %151 = vmatprep.subr.bf16.mxu0 0
    %152 = vmatpush2.bf16.msra.mxu0 0
    %153 = vmatprep.subr.bf16.mxu0 0
    %154 = vmatpush2.bf16.msra.mxu0 0
    %155 = vmatprep.subr.bf16.mxu0 0
    %156 = vmatpush2.bf16.msra.mxu0 0
    %157 = vmatprep.subr.bf16.mxu0 0
    %158 = vmatpush2.bf16.msra.mxu0 0
    %159 = vmatprep.subr.bf16.mxu0 0
    %160 = vmatpush2.bf16.msra.mxu0 0
    %161 = vmatprep.subr.bf16.mxu0 0
    %162 = vmatpush2.bf16.msra.mxu0 0
    %163 = vmatprep.subr.bf16.mxu0 0
    %164 = vmatpush2.bf16.msra.mxu0 0
    %165 = vmatprep.subr.bf16.mxu0 0
    %166 = vmatpush2.bf16.msra.mxu0 0
    %167 = vmatprep.mubr.bf16.mxu0 0
    %168 = vmatmul.mubr.bf16.gmra.mxu0 %v133
    %v169 = vpop.f32.mrf.mxu0
    %v170 = vadd.f32 0.0, %v169
    %v171 = vpop.f32.mrf.mxu0
    %v172 = vpop.f32.mrf.mxu0
    %v173 = vadd.f32 0.0, %v172
    %v174 = vpop.f32.mrf.mxu0
    %175 = vdwg.mxu0
    %v176 = vlaneseq
    %v177 = vshrl.u32 %v176, 7
    %v178 = vmul.u32 %v177, 8
    %vm179 = vcmp.ge.s32.totalorder %v101, %v178
    %v180 = vadd.s32 %v177, 1
    %v181 = vmul.u32 %v180, 8
    %vm182 = vcmp.lt.s32.totalorder %v101, %v181
    %vm183 = vmand %vm179, %vm182
    %v184 = vsel %vm183, 1, 0
    %v185 = vcvt.s32.f32 %v184
    %v186 = vpack.c.bf16 %v185, %v185
    %v187 = vpack.c.bf16 %v173, %v170
    %vm188 = vcmask 130048
    %v190 = vsel %vm188, %v186, 0
    %192 = vmatprep.subr.bf16.mxu0 0
    %193 = vmatpush1.bf16.msra.mxu0 0
    %194 = vmatprep.subr.bf16.mxu0 0
    %195 = vmatpush1.bf16.msra.mxu0 0
    %196 = vmatprep.subr.bf16.mxu0 0
    %197 = vmatpush1.bf16.msra.mxu0 0
    %198 = vmatprep.subr.bf16.mxu0 0
    %199 = vmatpush1.bf16.msra.mxu0 0
    %200 = vmatprep.subr.bf16.mxu0 0
    %201 = vmatpush1.bf16.msra.mxu0 0
    %202 = vmatprep.subr.bf16.mxu0 0
    %203 = vmatpush1.bf16.msra.mxu0 0
    %204 = vmatprep.subr.bf16.mxu0 0
    %205 = vmatpush1.bf16.msra.mxu0 0
    %206 = vmatprep.subr.bf16.mxu0 0
    %207 = vmatpush1.bf16.msra.mxu0 %v187
    %208 = vmatprep.subr.bf16.mxu0 0
    %209 = vmatpush2.bf16.msra.mxu0 0
    %210 = vmatprep.subr.bf16.mxu0 0
    %211 = vmatpush2.bf16.msra.mxu0 0
    %212 = vmatprep.subr.bf16.mxu0 0
    %213 = vmatpush2.bf16.msra.mxu0 0
    %214 = vmatprep.subr.bf16.mxu0 0
    %215 = vmatpush2.bf16.msra.mxu0 0
    %216 = vmatprep.subr.bf16.mxu0 0
    %217 = vmatpush2.bf16.msra.mxu0 0
    %218 = vmatprep.subr.bf16.mxu0 0
    %219 = vmatpush2.bf16.msra.mxu0 0
    %220 = vmatprep.subr.bf16.mxu0 0
    %221 = vmatpush2.bf16.msra.mxu0 0
    %222 = vmatprep.subr.bf16.mxu0 0
    %223 = vmatpush2.bf16.msra.mxu0 0
    %224 = vmatprep.mubr.bf16.mxu0 0
    %225 = vmatmul.mubr.bf16.gmra.mxu0 %v190
    %v226 = vpop.f32.mrf.mxu0
    %v227 = vadd.f32 0.0, %v226
    %v228 = vpop.f32.mrf.mxu0
    %v229 = vpop.f32.mrf.mxu0
    %v230 = vpop.f32.mrf.mxu0
    %231 = vdwg.mxu0
    %v232 = vmul.f32 %v227, 0.125
    %v233 = vpack.c.bf16 %v232, %v232
    %v234 = vld [vmem:[%s5] sm:$0xf]
    %v235 = vld [vmem:[%s5 + $0x4] sm:$0xf]
    %v236 = vld [vmem:[%s5 + $0x8] sm:$0xf]
    %v237 = vld [vmem:[%s5 + $0xc] sm:$0xf]
    %v238 = vld [vmem:[%s6] sm:$0x1]
    %v240 = vlaneseq
    %v241 = vshrl.u32 %v240, 7
    %v242 = vsub.s32 0, %v241
    %v243 = vrot.slane %v238, %v242
    %v249 = vunpack.c.l.b16 %v234
    %v250 = vunpack.c.l.b16 %v235
    %v251 = vunpack.c.l.b16 %v236
    %v252 = vunpack.c.l.b16 %v237
    %v253 = vpack.c.b16 %v250, %v249
    %v254 = vpack.c.b16 %v252, %v251
    %v258 = vsel %vm131, %v233, 0
    %260 = vmatprep.subr.bf16.mxu0 0
    %261 = vmatpush1.bf16.msra.mxu0 0
    %262 = vmatprep.subr.bf16.mxu0 0
    %263 = vmatpush1.bf16.msra.mxu0 0
    %264 = vmatprep.subr.bf16.mxu0 0
    %265 = vmatpush1.bf16.msra.mxu0 0
    %266 = vmatprep.subr.bf16.mxu0 0
    %267 = vmatpush1.bf16.msra.mxu0 0
    %268 = vmatprep.subr.bf16.mxu0 0
    %269 = vmatpush1.bf16.msra.mxu0 0
    %270 = vmatprep.subr.bf16.mxu0 0
    %271 = vmatpush1.bf16.msra.mxu0 0
    %272 = vmatprep.subr.bf16.mxu0 0
    %273 = vmatpush1.bf16.msra.mxu0 %v254
    %274 = vmatprep.subr.bf16.mxu0 0
    %275 = vmatpush1.bf16.msra.mxu0 %v253
    %276 = vmatprep.subr.bf16.mxu0 0
    %277 = vmatpush2.bf16.msra.mxu0 0
    %278 = vmatprep.subr.bf16.mxu0 0
    %279 = vmatpush2.bf16.msra.mxu0 0
    %280 = vmatprep.subr.bf16.mxu0 0
    %281 = vmatpush2.bf16.msra.mxu0 0
    %282 = vmatprep.subr.bf16.mxu0 0
    %283 = vmatpush2.bf16.msra.mxu0 0
    %284 = vmatprep.subr.bf16.mxu0 0
    %285 = vmatpush2.bf16.msra.mxu0 0
    %286 = vmatprep.subr.bf16.mxu0 0
    %287 = vmatpush2.bf16.msra.mxu0 0
    %288 = vmatprep.subr.bf16.mxu0 0
    %289 = vmatpush2.bf16.msra.mxu0 0
    %290 = vmatprep.subr.bf16.mxu0 0
    %291 = vmatpush2.bf16.msra.mxu0 0
    %292 = vmatprep.mubr.bf16.mxu0 0
    %293 = vmatmul.mubr.bf16.gmra.mxu0 %v258
    %v294 = vpop.f32.mrf.mxu0
    %v295 = vadd.f32 %v243, %v294
    %v296 = vpop.f32.mrf.mxu0
    %v297 = vpop.f32.mrf.mxu0
    %v298 = vpop.f32.mrf.mxu0
    %299 = vdwg.mxu0
    %v300 = vld [vmem:[%s1] sm:$0xff]
    %301 = vset.pattern.permute.xlu0 0
    %302 = vperm.xlu0 %301, %v300
    %v303 = vpop.permute.xlu0 %302
    %vm304 = vcmp.eq.s32.totalorder %v303, %v101
    %v305 = vsel %vm304, 1, 0
    %v306 = vcvt.s32.f32 %v305
    %v307 = vpack.c.bf16 %v306, %v306
    %v308 = vld [vmem:[#allocation2] sm:$0xf]
    %v309 = vld [vmem:[#allocation2 + $0x4] sm:$0xf]
    %v312 = vunpack.c.l.b16 %v308
    %v313 = vunpack.c.l.b16 %v309
    %v314 = vpack.c.b16 %v313, %v312
    %v317 = vsel %vm188, %v307, 0
    %319 = vmatprep.subr.bf16.mxu0 0
    %320 = vmatpush1.bf16.msra.mxu0 0
    %321 = vmatprep.subr.bf16.mxu0 0
    %322 = vmatpush1.bf16.msra.mxu0 0
    %323 = vmatprep.subr.bf16.mxu0 0
    %324 = vmatpush1.bf16.msra.mxu0 0
    %325 = vmatprep.subr.bf16.mxu0 0
    %326 = vmatpush1.bf16.msra.mxu0 0
    %327 = vmatprep.subr.bf16.mxu0 0
    %328 = vmatpush1.bf16.msra.mxu0 0
    %329 = vmatprep.subr.bf16.mxu0 0
    %330 = vmatpush1.bf16.msra.mxu0 0
    %331 = vmatprep.subr.bf16.mxu0 0
    %332 = vmatpush1.bf16.msra.mxu0 0
    %333 = vmatprep.subr.bf16.mxu0 0
    %334 = vmatpush1.bf16.msra.mxu0 %v314
    %335 = vmatprep.subr.bf16.mxu0 0
    %336 = vmatpush2.bf16.msra.mxu0 0
    %337 = vmatprep.subr.bf16.mxu0 0
    %338 = vmatpush2.bf16.msra.mxu0 0
    %339 = vmatprep.subr.bf16.mxu0 0
    %340 = vmatpush2.bf16.msra.mxu0 0
    %341 = vmatprep.subr.bf16.mxu0 0
    %342 = vmatpush2.bf16.msra.mxu0 0
    %343 = vmatprep.subr.bf16.mxu0 0
    %344 = vmatpush2.bf16.msra.mxu0 0
    %345 = vmatprep.subr.bf16.mxu0 0
    %346 = vmatpush2.bf16.msra.mxu0 0
    %347 = vmatprep.subr.bf16.mxu0 0
    %348 = vmatpush2.bf16.msra.mxu0 0
    %349 = vmatprep.subr.bf16.mxu0 0
    %350 = vmatpush2.bf16.msra.mxu0 0
    %351 = vmatprep.mubr.bf16.mxu0 0
    %352 = vmatmul.mubr.bf16.gmra.mxu0 %v317
    %v353 = vpop.f32.mrf.mxu0
    %v354 = vadd.f32 0.0, %v353
    %v355 = vpop.f32.mrf.mxu0
    %v356 = vpop.f32.mrf.mxu0
    %v357 = vpop.f32.mrf.mxu0
    %358 = vdwg.mxu0
    %v359 = vld [vmem:[%s2] sm:$0x1]
    %v360 = vlaneseq
    %v361 = vshrl.u32 %v360, 7
    %v362 = vsub.s32 0, %v361
    %v363 = vrot.slane %v359, %v362
    %vm364 = vcmp.eq.s32.totalorder %v363, %v177
    %v365 = vsel %vm364, 1, 0
    %v366 = vcvt.s32.f32 %v365
    %vm367 = vcmask 58368
    %v368 = vsel %vm367, %v366, 0.0
    %369 = vadd.xlane.f32.xlu0 %v368
    %v370 = vpop.xlane.xlu0 %369
    %v371 = vpack.c.bf16 %v366, %v366
    %v372 = vpack.c.bf16 %v354, %v354
    %vm373 = vcmask 64512
    %v375 = vsel %vm373, %v371, 0
    %vm377 = vcmask 1043456
    %v379 = vsel %vm377, %v372, 0
    %381 = vmatprep.subr.bf16.mxu0 0
    %382 = vmatpush1.bf16.msra.mxu0 0
    %383 = vmatprep.subr.bf16.mxu0 0
    %384 = vmatpush1.bf16.msra.mxu0 0
    %385 = vmatprep.subr.bf16.mxu0 0
    %386 = vmatpush1.bf16.msra.mxu0 0
    %387 = vmatprep.subr.bf16.mxu0 0
    %388 = vmatpush1.bf16.msra.mxu0 0
    %389 = vmatprep.subr.bf16.mxu0 0
    %390 = vmatpush1.bf16.msra.mxu0 0
    %391 = vmatprep.subr.bf16.mxu0 0
    %392 = vmatpush1.bf16.msra.mxu0 0
    %393 = vmatprep.subr.bf16.mxu0 0
    %394 = vmatpush1.bf16.msra.mxu0 0
    %395 = vmatprep.subr.bf16.mxu0 0
    %396 = vmatpush1.bf16.msra.mxu0 %v379
    %397 = vmatprep.subr.bf16.mxu0 0
    %398 = vmatpush2.bf16.msra.mxu0 0
    %399 = vmatprep.subr.bf16.mxu0 0
    %400 = vmatpush2.bf16.msra.mxu0 0
    %401 = vmatprep.subr.bf16.mxu0 0
    %402 = vmatpush2.bf16.msra.mxu0 0
    %403 = vmatprep.subr.bf16.mxu0 0
    %404 = vmatpush2.bf16.msra.mxu0 0
    %405 = vmatprep.subr.bf16.mxu0 0
    %406 = vmatpush2.bf16.msra.mxu0 0
    %407 = vmatprep.subr.bf16.mxu0 0
    %408 = vmatpush2.bf16.msra.mxu0 0
    %409 = vmatprep.subr.bf16.mxu0 0
    %410 = vmatpush2.bf16.msra.mxu0 0
    %411 = vmatprep.subr.bf16.mxu0 0
    %412 = vmatpush2.bf16.msra.mxu0 0
    %413 = vmatprep.mubr.bf16.mxu0 0
    %414 = vmatmul.mubr.bf16.gmra.mxu0 %v375
    %v415 = vpop.f32.mrf.mxu0
    %v416 = vadd.f32 0.0, %v415
    %v417 = vpop.f32.mrf.mxu0
    %v418 = vpop.f32.mrf.mxu0
    %v419 = vpop.f32.mrf.mxu0
    %420 = vdwg.mxu0
    %v421 = vmax.f32 %v370, 1.0
    %v422 = vrcp.pop %v421
    %v423 = vmul.f32 %v416, %v422
    %v424 = vpack.c.bf16 %v423, %v423
    %v425 = vld [vmem:[#allocation5] sm:$0xf]
    %v426 = vld [vmem:[#allocation5 + $0x4] sm:$0xf]
    %v427 = vld [vmem:[#allocation5 + $0x8] sm:$0xf]
    %v428 = vld [vmem:[#allocation5 + $0xc] sm:$0xf]
    %v429 = vld [vmem:[#allocation5 + $0x10] sm:$0xf]
    %v430 = vld [vmem:[#allocation5 + $0x14] sm:$0xf]
    %v431 = vld [vmem:[#allocation5 + $0x18] sm:$0xf]
    %v432 = vld [vmem:[#allocation5 + $0x1c] sm:$0xf]
    %v433 = vld [vmem:[#allocation5 + $0x20] sm:$0xf]
    %v434 = vld [vmem:[#allocation5 + $0x24] sm:$0xf]
    %v435 = vld [vmem:[#allocation5 + $0x28] sm:$0xf]
    %v436 = vld [vmem:[#allocation5 + $0x2c] sm:$0xf]
    %v437 = vld [vmem:[#allocation5 + $0x30] sm:$0xf]
    %v438 = vld [vmem:[#allocation5 + $0x34] sm:$0xf]
    %v439 = vld [vmem:[#allocation5 + $0x38] sm:$0xf]
    %v440 = vld [vmem:[#allocation5 + $0x3c] sm:$0xf]
    %v441 = vpack.c.bf16 %v295, %v295
    %v442 = vld [vmem:[#allocation7] sm:$0xf]
    %v443 = vld [vmem:[#allocation7 + $0x4] sm:$0xf]
    %v444 = vld [vmem:[#allocation7 + $0x8] sm:$0xf]
    %v445 = vld [vmem:[#allocation7 + $0xc] sm:$0xf]
    %v446 = vld [vmem:[#allocation7 + $0x10] sm:$0xf]
    %v447 = vld [vmem:[#allocation7 + $0x14] sm:$0xf]
    %v448 = vld [vmem:[#allocation7 + $0x18] sm:$0xf]
    %v449 = vld [vmem:[#allocation7 + $0x1c] sm:$0xf]
    %v450 = vld [vmem:[#allocation7 + $0x20] sm:$0xf]
    %v451 = vld [vmem:[#allocation7 + $0x24] sm:$0xf]
    %v452 = vld [vmem:[#allocation7 + $0x28] sm:$0xf]
    %v453 = vld [vmem:[#allocation7 + $0x2c] sm:$0xf]
    %v454 = vld [vmem:[#allocation7 + $0x30] sm:$0xf]
    %v455 = vld [vmem:[#allocation7 + $0x34] sm:$0xf]
    %v456 = vld [vmem:[#allocation7 + $0x38] sm:$0xf]
    %v457 = vld [vmem:[#allocation7 + $0x3c] sm:$0xf]
    %v474 = vunpack.c.l.b16 %v442
    %v475 = vunpack.c.l.b16 %v443
    %v476 = vunpack.c.l.b16 %v444
    %v477 = vunpack.c.l.b16 %v445
    %v478 = vunpack.c.l.b16 %v446
    %v479 = vunpack.c.l.b16 %v447
    %v480 = vunpack.c.l.b16 %v448
    %v481 = vunpack.c.l.b16 %v449
    %v482 = vunpack.c.l.b16 %v450
    %v483 = vunpack.c.l.b16 %v451
    %v484 = vunpack.c.l.b16 %v452
    %v485 = vunpack.c.l.b16 %v453
    %v486 = vunpack.c.l.b16 %v454
    %v487 = vunpack.c.l.b16 %v455
    %v488 = vunpack.c.l.b16 %v456
    %v489 = vunpack.c.l.b16 %v457
    %v490 = vpack.c.b16 %v475, %v474
    %v491 = vpack.c.b16 %v477, %v476
    %v492 = vpack.c.b16 %v479, %v478
    %v493 = vpack.c.b16 %v481, %v480
    %v494 = vpack.c.b16 %v483, %v482
    %v495 = vpack.c.b16 %v485, %v484
    %v496 = vpack.c.b16 %v487, %v486
    %v497 = vpack.c.b16 %v489, %v488
    %506 = vmatprep.subr.bf16.mxu0 0
    %507 = vmatpush1.bf16.msra.mxu0 %v497
    %508 = vmatprep.subr.bf16.mxu0 0
    %509 = vmatpush1.bf16.msra.mxu0 %v496
    %510 = vmatprep.subr.bf16.mxu0 0
    %511 = vmatpush1.bf16.msra.mxu0 %v495
    %512 = vmatprep.subr.bf16.mxu0 0
    %513 = vmatpush1.bf16.msra.mxu0 %v494
    %514 = vmatprep.subr.bf16.mxu0 0
    %515 = vmatpush1.bf16.msra.mxu0 %v493
    %516 = vmatprep.subr.bf16.mxu0 0
    %517 = vmatpush1.bf16.msra.mxu0 %v492
    %518 = vmatprep.subr.bf16.mxu0 0
    %519 = vmatpush1.bf16.msra.mxu0 %v491
    %520 = vmatprep.subr.bf16.mxu0 0
    %521 = vmatpush1.bf16.msra.mxu0 %v490
    %522 = vmatprep.subr.bf16.mxu0 0
    %523 = vmatpush2.bf16.msra.mxu0 0
    %524 = vmatprep.subr.bf16.mxu0 0
    %525 = vmatpush2.bf16.msra.mxu0 0
    %526 = vmatprep.subr.bf16.mxu0 0
    %527 = vmatpush2.bf16.msra.mxu0 0
    %528 = vmatprep.subr.bf16.mxu0 0
    %529 = vmatpush2.bf16.msra.mxu0 0
    %530 = vmatprep.subr.bf16.mxu0 0
    %531 = vmatpush2.bf16.msra.mxu0 0
    %532 = vmatprep.subr.bf16.mxu0 0
    %533 = vmatpush2.bf16.msra.mxu0 0
    %534 = vmatprep.subr.bf16.mxu0 0
    %535 = vmatpush2.bf16.msra.mxu0 0
    %536 = vmatprep.subr.bf16.mxu0 0
    %537 = vmatpush2.bf16.msra.mxu0 0
    %538 = vmatprep.mubr.bf16.mxu0 0
    %539 = vmatmul.mubr.bf16.gmra.mxu0 %v441
    %v540 = vpop.f32.mrf.mxu0
    %v541 = vadd.f32 0.0, %v540
    %v542 = vpop.f32.mrf.mxu0
    %v543 = vpop.f32.mrf.mxu0
    %v544 = vpop.f32.mrf.mxu0
    %545 = vdwg.mxu0
    %v562 = vunpack.c.l.b16 %v425
    %v563 = vunpack.c.l.b16 %v426
    %v564 = vunpack.c.l.b16 %v427
    %v565 = vunpack.c.l.b16 %v428
    %v566 = vunpack.c.l.b16 %v429
    %v567 = vunpack.c.l.b16 %v430
    %v568 = vunpack.c.l.b16 %v431
    %v569 = vunpack.c.l.b16 %v432
    %v570 = vunpack.c.l.b16 %v433
    %v571 = vunpack.c.l.b16 %v434
    %v572 = vunpack.c.l.b16 %v435
    %v573 = vunpack.c.l.b16 %v436
    %v574 = vunpack.c.l.b16 %v437
    %v575 = vunpack.c.l.b16 %v438
    %v576 = vunpack.c.l.b16 %v439
    %v577 = vunpack.c.l.b16 %v440
    %v578 = vpack.c.b16 %v563, %v562
    %v579 = vpack.c.b16 %v565, %v564
    %v580 = vpack.c.b16 %v567, %v566
    %v581 = vpack.c.b16 %v569, %v568
    %v582 = vpack.c.b16 %v571, %v570
    %v583 = vpack.c.b16 %v573, %v572
    %v584 = vpack.c.b16 %v575, %v574
    %v585 = vpack.c.b16 %v577, %v576
    %594 = vmatprep.subr.bf16.mxu0 0
    %595 = vmatpush1.bf16.msra.mxu0 %v585
    %596 = vmatprep.subr.bf16.mxu0 0
    %597 = vmatpush1.bf16.msra.mxu0 %v584
    %598 = vmatprep.subr.bf16.mxu0 0
    %599 = vmatpush1.bf16.msra.mxu0 %v583
    %600 = vmatprep.subr.bf16.mxu0 0
    %601 = vmatpush1.bf16.msra.mxu0 %v582
    %602 = vmatprep.subr.bf16.mxu0 0
    %603 = vmatpush1.bf16.msra.mxu0 %v581
    %604 = vmatprep.subr.bf16.mxu0 0
    %605 = vmatpush1.bf16.msra.mxu0 %v580
    %606 = vmatprep.subr.bf16.mxu0 0
    %607 = vmatpush1.bf16.msra.mxu0 %v579
    %608 = vmatprep.subr.bf16.mxu0 0
    %609 = vmatpush1.bf16.msra.mxu0 %v578
    %610 = vmatprep.subr.bf16.mxu0 0
    %611 = vmatpush2.bf16.msra.mxu0 0
    %612 = vmatprep.subr.bf16.mxu0 0
    %613 = vmatpush2.bf16.msra.mxu0 0
    %614 = vmatprep.subr.bf16.mxu0 0
    %615 = vmatpush2.bf16.msra.mxu0 0
    %616 = vmatprep.subr.bf16.mxu0 0
    %617 = vmatpush2.bf16.msra.mxu0 0
    %618 = vmatprep.subr.bf16.mxu0 0
    %619 = vmatpush2.bf16.msra.mxu0 0
    %620 = vmatprep.subr.bf16.mxu0 0
    %621 = vmatpush2.bf16.msra.mxu0 0
    %622 = vmatprep.subr.bf16.mxu0 0
    %623 = vmatpush2.bf16.msra.mxu0 0
    %624 = vmatprep.subr.bf16.mxu0 0
    %625 = vmatpush2.bf16.msra.mxu0 0
    %626 = vmatprep.mubr.bf16.mxu0 0
    %627 = vmatmul.mubr.bf16.gmra.mxu0 %v424
    %v628 = vpop.f32.mrf.mxu0
    %v629 = vadd.f32 %v541, %v628
    %v630 = vpop.f32.mrf.mxu0
    %v631 = vpop.f32.mrf.mxu0
    %v632 = vpop.f32.mrf.mxu0
    %633 = vdwg.mxu0
    %v634 = vld [vmem:[%s9] sm:$0x1]
    %v636 = vlaneseq
    %v637 = vshrl.u32 %v636, 7
    %v638 = vsub.s32 0, %v637
    %v639 = vrot.slane %v634, %v638
    %v641 = vadd.f32 %v629, %v639
    %vm642 = vcmp.gt.f32.partialorder %v641, 0.0
    %v643 = vmul.f32 %v641, 0.01
    %v644 = vsel %vm642, %v641, %v643
    %v645 = vpack.c.bf16 %v644, %v644
    %v646 = vld [vmem:[#allocation8] sm:$0xf]
    %v647 = vld [vmem:[#allocation8 + $0x4] sm:$0xf]
    %v648 = vld [vmem:[#allocation8 + $0x8] sm:$0xf]
    %v649 = vld [vmem:[#allocation8 + $0xc] sm:$0xf]
    %v650 = vld [vmem:[#allocation8 + $0x10] sm:$0xf]
    %v651 = vld [vmem:[#allocation8 + $0x14] sm:$0xf]
    %v652 = vld [vmem:[#allocation8 + $0x18] sm:$0xf]
    %v653 = vld [vmem:[#allocation8 + $0x1c] sm:$0xf]
    %v654 = vld [vmem:[#allocation8 + $0x20] sm:$0xf]
    %v655 = vld [vmem:[#allocation8 + $0x24] sm:$0xf]
    %v656 = vld [vmem:[#allocation8 + $0x28] sm:$0xf]
    %v657 = vld [vmem:[#allocation8 + $0x2c] sm:$0xf]
    %v658 = vld [vmem:[#allocation8 + $0x30] sm:$0xf]
    %v659 = vld [vmem:[#allocation8 + $0x34] sm:$0xf]
    %v660 = vld [vmem:[#allocation8 + $0x38] sm:$0xf]
    %v661 = vld [vmem:[#allocation8 + $0x3c] sm:$0xf]
    %v662 = vld [vmem:[%s11] sm:$0x1]
    %v664 = vlaneseq
    %v665 = vshrl.u32 %v664, 7
    %v666 = vsub.s32 0, %v665
    %v667 = vrot.slane %v662, %v666
    %v685 = vunpack.c.l.b16 %v646
    %v686 = vunpack.c.l.b16 %v647
    %v687 = vunpack.c.l.b16 %v648
    %v688 = vunpack.c.l.b16 %v649
    %v689 = vunpack.c.l.b16 %v650
    %v690 = vunpack.c.l.b16 %v651
    %v691 = vunpack.c.l.b16 %v652
    %v692 = vunpack.c.l.b16 %v653
    %v693 = vunpack.c.l.b16 %v654
    %v694 = vunpack.c.l.b16 %v655
    %v695 = vunpack.c.l.b16 %v656
    %v696 = vunpack.c.l.b16 %v657
    %v697 = vunpack.c.l.b16 %v658
    %v698 = vunpack.c.l.b16 %v659
    %v699 = vunpack.c.l.b16 %v660
    %v700 = vunpack.c.l.b16 %v661
    %v701 = vpack.c.b16 %v686, %v685
    %v702 = vpack.c.b16 %v688, %v687
    %v703 = vpack.c.b16 %v690, %v689
    %v704 = vpack.c.b16 %v692, %v691
    %v705 = vpack.c.b16 %v694, %v693
    %v706 = vpack.c.b16 %v696, %v695
    %v707 = vpack.c.b16 %v698, %v697
    %v708 = vpack.c.b16 %v700, %v699
    %717 = vmatprep.subr.bf16.mxu0 0
    %718 = vmatpush1.bf16.msra.mxu0 %v708
    %719 = vmatprep.subr.bf16.mxu0 0
    %720 = vmatpush1.bf16.msra.mxu0 %v707
    %721 = vmatprep.subr.bf16.mxu0 0
    %722 = vmatpush1.bf16.msra.mxu0 %v706
    %723 = vmatprep.subr.bf16.mxu0 0
    %724 = vmatpush1.bf16.msra.mxu0 %v705
    %725 = vmatprep.subr.bf16.mxu0 0
    %726 = vmatpush1.bf16.msra.mxu0 %v704
    %727 = vmatprep.subr.bf16.mxu0 0
    %728 = vmatpush1.bf16.msra.mxu0 %v703
    %729 = vmatprep.subr.bf16.mxu0 0
    %730 = vmatpush1.bf16.msra.mxu0 %v702
    %731 = vmatprep.subr.bf16.mxu0 0
    %732 = vmatpush1.bf16.msra.mxu0 %v701
    %733 = vmatprep.subr.bf16.mxu0 0
    %734 = vmatpush2.bf16.msra.mxu0 0
    %735 = vmatprep.subr.bf16.mxu0 0
    %736 = vmatpush2.bf16.msra.mxu0 0
    %737 = vmatprep.subr.bf16.mxu0 0
    %738 = vmatpush2.bf16.msra.mxu0 0
    %739 = vmatprep.subr.bf16.mxu0 0
    %740 = vmatpush2.bf16.msra.mxu0 0
    %741 = vmatprep.subr.bf16.mxu0 0
    %742 = vmatpush2.bf16.msra.mxu0 0
    %743 = vmatprep.subr.bf16.mxu0 0
    %744 = vmatpush2.bf16.msra.mxu0 0
    %745 = vmatprep.subr.bf16.mxu0 0
    %746 = vmatpush2.bf16.msra.mxu0 0
    %747 = vmatprep.subr.bf16.mxu0 0
    %748 = vmatpush2.bf16.msra.mxu0 0
    %749 = vmatprep.mubr.bf16.mxu0 0
    %750 = vmatmul.mubr.bf16.gmra.mxu0 %v645
    %v751 = vpop.f32.mrf.mxu0
    %v752 = vadd.f32 %v667, %v751
    %v753 = vpop.f32.mrf.mxu0
    %v754 = vpop.f32.mrf.mxu0
    %v755 = vpop.f32.mrf.mxu0
    %756 = vdwg.mxu0
    %v757 = vxor.u32 %v752, 2147483648
    %v758 = vmul.f32 %v757, 1.442695
    %v759 = vpow.pop %v758
    %v760 = vadd.f32 %v759, 1.0
    %v761 = vrcp.pop %v760
    %v762 = vmul.f32 1.0, %v761
    %763 = vst [vmem:[#allocation10] sm:$0x3] %v762
    // Predicated region
    $region66: #{tpu_custom_call.1} parent=1 // pred_check
      _
    $region67: #{tpu_custom_call.1} parent=1 // pred_check_branch
      %765 = sbr.rel (0) target = $region69
    $region68: #{tpu_custom_call.1} parent=1 // pred_region
      %s767 = ssub.s32 32, 32
      %768 = vsyncadd [#allocation4], %s767
      %s770 = sshll.u32 [#allocation10], 4
      %s771 = int_to_ptr.vmem [resolvable:$true] %s770
      %773 = dma.vmem_to_hbm [thread:$0]  %s771, 32, %s12, [#allocation4]
    $region69: #{tpu_custom_call.1} parent=1 // pred_fallthru
      _
    // Predicated region
    $region70: #{tpu_custom_call.1} parent=1 // pred_check
      _
    $region71: #{tpu_custom_call.1} parent=1 // pred_check_branch
      %775 = sbr.rel (0) target = $region73
    $region72: #{tpu_custom_call.1} parent=1 // pred_region
      %776 = dma.done [#allocation4], 32
    $region73: #{tpu_custom_call.1} parent=1 // pred_fallthru
      _
    %777 = vsyncpa [#allocation3], 1
    %778 = vsyncpa [#allocation6], 1
    %779 = vsyncpa [#allocation9], 1
    %780 = vsyncpa [#allocation4], 1

</llo_original>
